<compile_context>
chip_gen: v7x
topology: tpu7x:2x2x1
jax: 0.10.0
libtpu: 0.0.40
codegen_flags: <defaults>
</compile_context>

<pallas_src>
import jax
import jax.numpy as jnp
from jax.experimental import pallas as pl
from jax.experimental.pallas import tpu as pltpu

EPS = 1e-5
P = 128          # lane-dense feature width of every layer's output tile
V_ROWS = 16      # rows in the bias/gamma/beta vector slab (sublane-aligned)


def _layer_dims(input_dim, latent_dim):
    return [(input_dim, 64), (64, 32), (32, latent_dim),   # encoder
            (latent_dim, 32), (32, 64), (64, input_dim)]   # decoder


def _slab_layout(input_dim, latent_dim):
    """Per-layer K block sizes (16-row aligned for bf16 packing) + offsets."""
    dims = _layer_dims(input_dim, latent_dim)
    ks = [((fi + 15) // 16) * 16 for fi, _ in dims]
    offs, o = [], 0
    for k in ks:
        offs.append(o)
        o += k
    return dims, ks, offs, o


def make_autoencoder_fn(input_dim, latent_dim):
    dims, ks, offs, k_total = _slab_layout(input_dim, latent_dim)
    # Effective dot depth per layer: layer 0 uses the raw (unpadded) x width,
    # later layers use the 16-aligned block (extra rows/lanes are exact zeros).
    kdot = [input_dim] + ks[1:]

    def kernel(x_ref, w_ref, v_ref, out_ref):
        # x_ref:  (N, input_dim) f32
        # w_ref:  (k_total, P)   bf16  -- flat weight slab, K trimmed per layer
        # v_ref:  (V_ROWS, P)    f32   -- rows 0..5 biases, 6..13 g/beta pairs
        # out_ref:(N, P)         f32   -- lane-dense; wrapper slices to input_dim
        n = x_ref.shape[0]
        inv_n = 1.0 / n

        def linear(h, i):
            k = kdot[i]
            hk = h if h.shape[1] == k else h[:, :k]
            acc = jnp.dot(hk.astype(jnp.bfloat16),            # bf16 MXU operands
                          w_ref[offs[i]:offs[i] + k, :],
                          preferred_element_type=jnp.float32)  # f32 accumulation
            return acc + v_ref[i:i + 1, :]                     # f32 bias, direct ref read

        def relu(h):
            return jnp.maximum(h, 0.0)

        def batchnorm(h, gi, bi):
            # One-pass training-mode batch statistics, all in f32.
            g = v_ref[gi:gi + 1, :]
            beta = v_ref[bi:bi + 1, :]
            s1 = jnp.sum(h, axis=0, keepdims=True)
            s2 = jnp.sum(h * h, axis=0, keepdims=True)
            mean = s1 * inv_n
            var = jnp.maximum(s2 * inv_n - mean * mean, 0.0)
            scale = g * jax.lax.rsqrt(var + EPS)   # (1, P)
            shift = beta - mean * scale            # (1, P)
            return h * scale + shift               # single FMA per element

        x = x_ref[...]
        # --- encoder ---
        h = relu(linear(x, 0))       # Linear(input_dim, 64) + ReLU
        h = batchnorm(h, 6, 7)       # BatchNorm1d(64)
        h = relu(linear(h, 1))       # Linear(64, 32) + ReLU
        h = batchnorm(h, 8, 9)       # BatchNorm1d(32)
        z = relu(linear(h, 2))       # Linear(32, latent) + ReLU
        # --- decoder ---
        h = relu(linear(z, 3))       # Linear(latent, 32) + ReLU
        h = batchnorm(h, 10, 11)     # BatchNorm1d(32)
        h = relu(linear(h, 4))       # Linear(32, 64) + ReLU
        h = batchnorm(h, 12, 13)     # BatchNorm1d(64)
        out_ref[...] = jnp.tanh(linear(h, 5))   # Linear(64, input_dim) + Tanh

    @jax.jit
    def forward(x, w_all, v_all):
        n = x.shape[0]
        vmem = pl.BlockSpec(memory_space=pltpu.MemorySpace.VMEM)
        flops = 2 * n * P * sum(kdot)
        transcendentals = n * P + 4 * P
        bytes_accessed = (x.size * 4 + w_all.size * 2 + v_all.size * 4 + n * P * 4)
        out_pad = pl.pallas_call(
            kernel,
            out_shape=jax.ShapeDtypeStruct((n, P), jnp.float32),
            in_specs=[vmem, vmem, vmem],
            out_specs=vmem,
            cost_estimate=pl.CostEstimate(flops=flops,
                                          transcendentals=transcendentals,
                                          bytes_accessed=bytes_accessed),
            compiler_params=pltpu.CompilerParams(
                vmem_limit_bytes=16 * 1024 * 1024),
        )(x, w_all, v_all)
        # Lane-dense (N, 128) store inside the kernel; slice fuses in this jit.
        return out_pad[:, :input_dim]

    return forward


def init_params(key, input_dim, latent_dim):
    """PyTorch-style U(-1/sqrt(fan_in), 1/sqrt(fan_in)) Linear init.

    PyTorch's BatchNorm1d default is gamma=1, beta=0; we perturb them slightly
    so the correctness check also exercises the affine path.
    """
    dims = _layer_dims(input_dim, latent_dim)
    bn_layers = (("1", 64), ("2", 32), ("4", 32), ("5", 64))
    keys = iter(jax.random.split(key, 2 * len(dims) + 2 * len(bn_layers)))
    params = {}
    for i, (fan_in, fan_out) in enumerate(dims):
        bound = float(fan_in) ** -0.5
        params[f"w{i+1}"] = jax.random.uniform(next(keys), (fan_in, fan_out),
                                               jnp.float32, -bound, bound)
        params[f"b{i+1}"] = jax.random.uniform(next(keys), (1, fan_out),
                                               jnp.float32, -bound, bound)
    for name, width in bn_layers:
        params[f"g{name}"] = 1.0 + 0.2 * jax.random.uniform(
            next(keys), (1, width), jnp.float32, -1.0, 1.0)
        params[f"be{name}"] = 0.1 * jax.random.uniform(
            next(keys), (1, width), jnp.float32, -1.0, 1.0)
    return params


def pack_params(params, input_dim, latent_dim):
    """Pack into one flat (k_total, 128) bf16 weight slab + one (16, 128) f32
    vector slab.  Padding is zeros everywhere (weights, biases, gamma, beta),
    so padded feature lanes stay exactly 0 through every layer."""
    dims, ks, offs, k_total = _slab_layout(input_dim, latent_dim)
    w_all = jnp.zeros((k_total, P), jnp.bfloat16)
    v_all = jnp.zeros((V_ROWS, P), jnp.float32)
    for i, (fi, fo) in enumerate(dims):
        w_all = w_all.at[offs[i]:offs[i] + fi, :fo].set(
            params[f"w{i+1}"].astype(jnp.bfloat16))
        v_all = v_all.at[i, :fo].set(params[f"b{i+1}"].reshape(-1))
    for j, (name, width) in enumerate((("1", 64), ("2", 32), ("4", 32), ("5", 64))):
        v_all = v_all.at[6 + 2 * j, :width].set(params[f"g{name}"].reshape(-1))
        v_all = v_all.at[7 + 2 * j, :width].set(params[f"be{name}"].reshape(-1))
    return w_all, v_all


def autoencoder_reference(x, params, dot_dtype=jnp.float32):
    """Pure-JAX reference (PyTorch training-mode BN semantics).  dot_dtype lets
    us also build a reference whose matmul-operand precision matches the kernel."""
    def linear(h, w, b):
        return jnp.dot(h.astype(dot_dtype), w.astype(dot_dtype),
                       preferred_element_type=jnp.float32) + b

    def bn(h, g, b):
        mean = jnp.mean(h, axis=0, keepdims=True)
        var = jnp.mean((h - mean) ** 2, axis=0, keepdims=True)
        return (h - mean) / jnp.sqrt(var + EPS) * g + b

    h = jax.nn.relu(linear(x, params["w1"], params["b1"]))
    h = bn(h, params["g1"], params["be1"])
    h = jax.nn.relu(linear(h, params["w2"], params["b2"]))
    h = bn(h, params["g2"], params["be2"])
    z = jax.nn.relu(linear(h, params["w3"], params["b3"]))
    h = jax.nn.relu(linear(z, params["w4"], params["b4"]))
    h = bn(h, params["g4"], params["be4"])
    h = jax.nn.relu(linear(h, params["w5"], params["b5"]))
    h = bn(h, params["g5"], params["be5"])
    return jnp.tanh(linear(h, params["w6"], params["b6"]))


if __name__ == "__main__":
    input_dim = 16
    latent_dim = 8
    batch = 32   # BatchNorm needs a sensible batch; still small.

    key = jax.random.PRNGKey(0)
    k_x, k_p = jax.random.split(key)
    x = jax.random.normal(k_x, (batch, input_dim), jnp.float32)
    params = init_params(k_p, input_dim, latent_dim)
    w_all, v_all = pack_params(params, input_dim, latent_dim)

    forward = make_autoencoder_fn(input_dim, latent_dim)
    out = jax.block_until_ready(forward(x, w_all, v_all))
    assert out.shape == (batch, input_dim)

    # (1) Tight-ish check vs a reference that uses the same bf16 matmul-operand
    #     precision as the kernel (validates the kernel math / packing).
    ref_bf16 = autoencoder_reference(x, params, jnp.bfloat16)
    assert jnp.allclose(out, ref_bf16, atol=5e-2, rtol=5e-2), \
        "mismatch vs bf16-operand reference"
    # (2) Loose sanity bound vs the full-f32 reference: training-mode BN
    #     normalization amplifies bf16 operand rounding, so this is coarse.
    ref_f32 = autoencoder_reference(x, params, jnp.float32)
    assert float(jnp.mean(jnp.abs(out - ref_f32))) < 5e-2, \
        "drift vs f32 reference"

    print("KERNEL_OK")
</pallas_src>

<mosaic_0001>
module attributes {stable_mosaic.version = 11 : i64} {
  func.func @kernel(%arg0: memref<32x16xf32, #tpu.memory_space<vmem>>, %arg1: memref<224x128xbf16, #tpu.memory_space<vmem>>, %arg2: memref<16x128xf32, #tpu.memory_space<vmem>>, %arg3: memref<32x128xf32, #tpu.memory_space<vmem>>) attributes {dimension_semantics = [], scalar_prefetch = 0 : i64, scratch_operands = 0 : i64, tpu.core_type = #tpu.core_type<tc>} {
    %c0 = arith.constant 0 : index
    %c0_0 = arith.constant 0 : index
    %0 = vector.load %arg0[%c0, %c0_0] : memref<32x16xf32, #tpu.memory_space<vmem>>, vector<32x16xf32>
    %1 = arith.truncf %0 : vector<32x16xf32> to vector<32x16xbf16>
    %c0_1 = arith.constant 0 : index
    %c0_2 = arith.constant 0 : index
    %2 = vector.load %arg1[%c0_1, %c0_2] : memref<224x128xbf16, #tpu.memory_space<vmem>>, vector<16x128xbf16>
    %cst = arith.constant dense<0.000000e+00> : vector<32x128xf32>
    %3 = tpu.matmul %1, %2, %cst {dimension_numbers = #tpu.dot_dimension_numbers<[1], [0], [0], [1], [0, 0, 1, 1], [], []>} : vector<32x16xbf16>, vector<16x128xbf16>, vector<32x128xf32> -> vector<32x128xf32>
    %c0_3 = arith.constant 0 : index
    %c0_4 = arith.constant 0 : index
    %4 = vector.load %arg2[%c0_3, %c0_4] : memref<16x128xf32, #tpu.memory_space<vmem>>, vector<1x128xf32>
    %5 = vector.broadcast %4 : vector<1x128xf32> to vector<32x128xf32>
    %6 = arith.addf %3, %5 : vector<32x128xf32>
    %cst_5 = arith.constant 0.000000e+00 : f32
    %7 = vector.broadcast %cst_5 : f32 to vector<32x128xf32>
    %8 = arith.maximumf %6, %7 : vector<32x128xf32>
    %c6 = arith.constant 6 : index
    %c0_6 = arith.constant 0 : index
    %9 = vector.load %arg2[%c6, %c0_6] : memref<16x128xf32, #tpu.memory_space<vmem>>, vector<1x128xf32>
    %c7 = arith.constant 7 : index
    %c0_7 = arith.constant 0 : index
    %10 = vector.load %arg2[%c7, %c0_7] : memref<16x128xf32, #tpu.memory_space<vmem>>, vector<1x128xf32>
    %cst_8 = arith.constant dense<0.000000e+00> : vector<128xf32>
    %11 = vector.multi_reduction <add>, %8, %cst_8 [0] : vector<32x128xf32> to vector<128xf32>
    %12 = vector.shape_cast %11 : vector<128xf32> to vector<1x128xf32>
    %13 = arith.mulf %8, %8 : vector<32x128xf32>
    %cst_9 = arith.constant dense<0.000000e+00> : vector<128xf32>
    %14 = vector.multi_reduction <add>, %13, %cst_9 [0] : vector<32x128xf32> to vector<128xf32>
    %15 = vector.shape_cast %14 : vector<128xf32> to vector<1x128xf32>
    %cst_10 = arith.constant 3.125000e-02 : f32
    %16 = vector.broadcast %cst_10 : f32 to vector<1x128xf32>
    %17 = arith.mulf %12, %16 : vector<1x128xf32>
    %cst_11 = arith.constant 3.125000e-02 : f32
    %18 = vector.broadcast %cst_11 : f32 to vector<1x128xf32>
    %19 = arith.mulf %15, %18 : vector<1x128xf32>
    %20 = arith.mulf %17, %17 : vector<1x128xf32>
    %21 = arith.subf %19, %20 : vector<1x128xf32>
    %cst_12 = arith.constant 0.000000e+00 : f32
    %22 = vector.broadcast %cst_12 : f32 to vector<1x128xf32>
    %23 = arith.maximumf %21, %22 : vector<1x128xf32>
    %cst_13 = arith.constant 9.99999974E-6 : f32
    %24 = vector.broadcast %cst_13 : f32 to vector<1x128xf32>
    %25 = arith.addf %23, %24 : vector<1x128xf32>
    %26 = math.rsqrt %25 : vector<1x128xf32>
    %27 = arith.mulf %9, %26 : vector<1x128xf32>
    %28 = arith.mulf %17, %27 : vector<1x128xf32>
    %29 = arith.subf %10, %28 : vector<1x128xf32>
    %30 = vector.broadcast %27 : vector<1x128xf32> to vector<32x128xf32>
    %31 = arith.mulf %8, %30 : vector<32x128xf32>
    %32 = vector.broadcast %29 : vector<1x128xf32> to vector<32x128xf32>
    %33 = arith.addf %31, %32 : vector<32x128xf32>
    %34 = vector.extract_strided_slice %33 {offsets = [0, 0], sizes = [32, 64], strides = [1, 1]} : vector<32x128xf32> to vector<32x64xf32>
    %35 = arith.truncf %34 : vector<32x64xf32> to vector<32x64xbf16>
    %c16 = arith.constant 16 : index
    %c0_14 = arith.constant 0 : index
    %36 = vector.load %arg1[%c16, %c0_14] : memref<224x128xbf16, #tpu.memory_space<vmem>>, vector<64x128xbf16>
    %cst_15 = arith.constant dense<0.000000e+00> : vector<32x128xf32>
    %37 = tpu.matmul %35, %36, %cst_15 {dimension_numbers = #tpu.dot_dimension_numbers<[1], [0], [0], [1], [0, 0, 1, 1], [], []>} : vector<32x64xbf16>, vector<64x128xbf16>, vector<32x128xf32> -> vector<32x128xf32>
    %c1 = arith.constant 1 : index
    %c0_16 = arith.constant 0 : index
    %38 = vector.load %arg2[%c1, %c0_16] : memref<16x128xf32, #tpu.memory_space<vmem>>, vector<1x128xf32>
    %39 = vector.broadcast %38 : vector<1x128xf32> to vector<32x128xf32>
    %40 = arith.addf %37, %39 : vector<32x128xf32>
    %cst_17 = arith.constant 0.000000e+00 : f32
    %41 = vector.broadcast %cst_17 : f32 to vector<32x128xf32>
    %42 = arith.maximumf %40, %41 : vector<32x128xf32>
    %c8 = arith.constant 8 : index
    %c0_18 = arith.constant 0 : index
    %43 = vector.load %arg2[%c8, %c0_18] : memref<16x128xf32, #tpu.memory_space<vmem>>, vector<1x128xf32>
    %c9 = arith.constant 9 : index
    %c0_19 = arith.constant 0 : index
    %44 = vector.load %arg2[%c9, %c0_19] : memref<16x128xf32, #tpu.memory_space<vmem>>, vector<1x128xf32>
    %cst_20 = arith.constant dense<0.000000e+00> : vector<128xf32>
    %45 = vector.multi_reduction <add>, %42, %cst_20 [0] : vector<32x128xf32> to vector<128xf32>
    %46 = vector.shape_cast %45 : vector<128xf32> to vector<1x128xf32>
    %47 = arith.mulf %42, %42 : vector<32x128xf32>
    %cst_21 = arith.constant dense<0.000000e+00> : vector<128xf32>
    %48 = vector.multi_reduction <add>, %47, %cst_21 [0] : vector<32x128xf32> to vector<128xf32>
    %49 = vector.shape_cast %48 : vector<128xf32> to vector<1x128xf32>
    %cst_22 = arith.constant 3.125000e-02 : f32
    %50 = vector.broadcast %cst_22 : f32 to vector<1x128xf32>
    %51 = arith.mulf %46, %50 : vector<1x128xf32>
    %cst_23 = arith.constant 3.125000e-02 : f32
    %52 = vector.broadcast %cst_23 : f32 to vector<1x128xf32>
    %53 = arith.mulf %49, %52 : vector<1x128xf32>
    %54 = arith.mulf %51, %51 : vector<1x128xf32>
    %55 = arith.subf %53, %54 : vector<1x128xf32>
    %cst_24 = arith.constant 0.000000e+00 : f32
    %56 = vector.broadcast %cst_24 : f32 to vector<1x128xf32>
    %57 = arith.maximumf %55, %56 : vector<1x128xf32>
    %cst_25 = arith.constant 9.99999974E-6 : f32
    %58 = vector.broadcast %cst_25 : f32 to vector<1x128xf32>
    %59 = arith.addf %57, %58 : vector<1x128xf32>
    %60 = math.rsqrt %59 : vector<1x128xf32>
    %61 = arith.mulf %43, %60 : vector<1x128xf32>
    %62 = arith.mulf %51, %61 : vector<1x128xf32>
    %63 = arith.subf %44, %62 : vector<1x128xf32>
    %64 = vector.broadcast %61 : vector<1x128xf32> to vector<32x128xf32>
    %65 = arith.mulf %42, %64 : vector<32x128xf32>
    %66 = vector.broadcast %63 : vector<1x128xf32> to vector<32x128xf32>
    %67 = arith.addf %65, %66 : vector<32x128xf32>
    %68 = vector.extract_strided_slice %67 {offsets = [0, 0], sizes = [32, 32], strides = [1, 1]} : vector<32x128xf32> to vector<32x32xf32>
    %69 = arith.truncf %68 : vector<32x32xf32> to vector<32x32xbf16>
    %c80 = arith.constant 80 : index
    %c0_26 = arith.constant 0 : index
    %70 = vector.load %arg1[%c80, %c0_26] : memref<224x128xbf16, #tpu.memory_space<vmem>>, vector<32x128xbf16>
    %cst_27 = arith.constant dense<0.000000e+00> : vector<32x128xf32>
    %71 = tpu.matmul %69, %70, %cst_27 {dimension_numbers = #tpu.dot_dimension_numbers<[1], [0], [0], [1], [0, 0, 1, 1], [], []>} : vector<32x32xbf16>, vector<32x128xbf16>, vector<32x128xf32> -> vector<32x128xf32>
    %c2 = arith.constant 2 : index
    %c0_28 = arith.constant 0 : index
    %72 = vector.load %arg2[%c2, %c0_28] : memref<16x128xf32, #tpu.memory_space<vmem>>, vector<1x128xf32>
    %73 = vector.broadcast %72 : vector<1x128xf32> to vector<32x128xf32>
    %74 = arith.addf %71, %73 : vector<32x128xf32>
    %cst_29 = arith.constant 0.000000e+00 : f32
    %75 = vector.broadcast %cst_29 : f32 to vector<32x128xf32>
    %76 = arith.maximumf %74, %75 : vector<32x128xf32>
    %77 = vector.extract_strided_slice %76 {offsets = [0, 0], sizes = [32, 16], strides = [1, 1]} : vector<32x128xf32> to vector<32x16xf32>
    %78 = arith.truncf %77 : vector<32x16xf32> to vector<32x16xbf16>
    %c112 = arith.constant 112 : index
    %c0_30 = arith.constant 0 : index
    %79 = vector.load %arg1[%c112, %c0_30] : memref<224x128xbf16, #tpu.memory_space<vmem>>, vector<16x128xbf16>
    %cst_31 = arith.constant dense<0.000000e+00> : vector<32x128xf32>
    %80 = tpu.matmul %78, %79, %cst_31 {dimension_numbers = #tpu.dot_dimension_numbers<[1], [0], [0], [1], [0, 0, 1, 1], [], []>} : vector<32x16xbf16>, vector<16x128xbf16>, vector<32x128xf32> -> vector<32x128xf32>
    %c3 = arith.constant 3 : index
    %c0_32 = arith.constant 0 : index
    %81 = vector.load %arg2[%c3, %c0_32] : memref<16x128xf32, #tpu.memory_space<vmem>>, vector<1x128xf32>
    %82 = vector.broadcast %81 : vector<1x128xf32> to vector<32x128xf32>
    %83 = arith.addf %80, %82 : vector<32x128xf32>
    %cst_33 = arith.constant 0.000000e+00 : f32
    %84 = vector.broadcast %cst_33 : f32 to vector<32x128xf32>
    %85 = arith.maximumf %83, %84 : vector<32x128xf32>
    %c10 = arith.constant 10 : index
    %c0_34 = arith.constant 0 : index
    %86 = vector.load %arg2[%c10, %c0_34] : memref<16x128xf32, #tpu.memory_space<vmem>>, vector<1x128xf32>
    %c11 = arith.constant 11 : index
    %c0_35 = arith.constant 0 : index
    %87 = vector.load %arg2[%c11, %c0_35] : memref<16x128xf32, #tpu.memory_space<vmem>>, vector<1x128xf32>
    %cst_36 = arith.constant dense<0.000000e+00> : vector<128xf32>
    %88 = vector.multi_reduction <add>, %85, %cst_36 [0] : vector<32x128xf32> to vector<128xf32>
    %89 = vector.shape_cast %88 : vector<128xf32> to vector<1x128xf32>
    %90 = arith.mulf %85, %85 : vector<32x128xf32>
    %cst_37 = arith.constant dense<0.000000e+00> : vector<128xf32>
    %91 = vector.multi_reduction <add>, %90, %cst_37 [0] : vector<32x128xf32> to vector<128xf32>
    %92 = vector.shape_cast %91 : vector<128xf32> to vector<1x128xf32>
    %cst_38 = arith.constant 3.125000e-02 : f32
    %93 = vector.broadcast %cst_38 : f32 to vector<1x128xf32>
    %94 = arith.mulf %89, %93 : vector<1x128xf32>
    %cst_39 = arith.constant 3.125000e-02 : f32
    %95 = vector.broadcast %cst_39 : f32 to vector<1x128xf32>
    %96 = arith.mulf %92, %95 : vector<1x128xf32>
    %97 = arith.mulf %94, %94 : vector<1x128xf32>
    %98 = arith.subf %96, %97 : vector<1x128xf32>
    %cst_40 = arith.constant 0.000000e+00 : f32
    %99 = vector.broadcast %cst_40 : f32 to vector<1x128xf32>
    %100 = arith.maximumf %98, %99 : vector<1x128xf32>
    %cst_41 = arith.constant 9.99999974E-6 : f32
    %101 = vector.broadcast %cst_41 : f32 to vector<1x128xf32>
    %102 = arith.addf %100, %101 : vector<1x128xf32>
    %103 = math.rsqrt %102 : vector<1x128xf32>
    %104 = arith.mulf %86, %103 : vector<1x128xf32>
    %105 = arith.mulf %94, %104 : vector<1x128xf32>
    %106 = arith.subf %87, %105 : vector<1x128xf32>
    %107 = vector.broadcast %104 : vector<1x128xf32> to vector<32x128xf32>
    %108 = arith.mulf %85, %107 : vector<32x128xf32>
    %109 = vector.broadcast %106 : vector<1x128xf32> to vector<32x128xf32>
    %110 = arith.addf %108, %109 : vector<32x128xf32>
    %111 = vector.extract_strided_slice %110 {offsets = [0, 0], sizes = [32, 32], strides = [1, 1]} : vector<32x128xf32> to vector<32x32xf32>
    %112 = arith.truncf %111 : vector<32x32xf32> to vector<32x32xbf16>
    %c128 = arith.constant 128 : index
    %c0_42 = arith.constant 0 : index
    %113 = vector.load %arg1[%c128, %c0_42] : memref<224x128xbf16, #tpu.memory_space<vmem>>, vector<32x128xbf16>
    %cst_43 = arith.constant dense<0.000000e+00> : vector<32x128xf32>
    %114 = tpu.matmul %112, %113, %cst_43 {dimension_numbers = #tpu.dot_dimension_numbers<[1], [0], [0], [1], [0, 0, 1, 1], [], []>} : vector<32x32xbf16>, vector<32x128xbf16>, vector<32x128xf32> -> vector<32x128xf32>
    %c4 = arith.constant 4 : index
    %c0_44 = arith.constant 0 : index
    %115 = vector.load %arg2[%c4, %c0_44] : memref<16x128xf32, #tpu.memory_space<vmem>>, vector<1x128xf32>
    %116 = vector.broadcast %115 : vector<1x128xf32> to vector<32x128xf32>
    %117 = arith.addf %114, %116 : vector<32x128xf32>
    %cst_45 = arith.constant 0.000000e+00 : f32
    %118 = vector.broadcast %cst_45 : f32 to vector<32x128xf32>
    %119 = arith.maximumf %117, %118 : vector<32x128xf32>
    %c12 = arith.constant 12 : index
    %c0_46 = arith.constant 0 : index
    %120 = vector.load %arg2[%c12, %c0_46] : memref<16x128xf32, #tpu.memory_space<vmem>>, vector<1x128xf32>
    %c13 = arith.constant 13 : index
    %c0_47 = arith.constant 0 : index
    %121 = vector.load %arg2[%c13, %c0_47] : memref<16x128xf32, #tpu.memory_space<vmem>>, vector<1x128xf32>
    %cst_48 = arith.constant dense<0.000000e+00> : vector<128xf32>
    %122 = vector.multi_reduction <add>, %119, %cst_48 [0] : vector<32x128xf32> to vector<128xf32>
    %123 = vector.shape_cast %122 : vector<128xf32> to vector<1x128xf32>
    %124 = arith.mulf %119, %119 : vector<32x128xf32>
    %cst_49 = arith.constant dense<0.000000e+00> : vector<128xf32>
    %125 = vector.multi_reduction <add>, %124, %cst_49 [0] : vector<32x128xf32> to vector<128xf32>
    %126 = vector.shape_cast %125 : vector<128xf32> to vector<1x128xf32>
    %cst_50 = arith.constant 3.125000e-02 : f32
    %127 = vector.broadcast %cst_50 : f32 to vector<1x128xf32>
    %128 = arith.mulf %123, %127 : vector<1x128xf32>
    %cst_51 = arith.constant 3.125000e-02 : f32
    %129 = vector.broadcast %cst_51 : f32 to vector<1x128xf32>
    %130 = arith.mulf %126, %129 : vector<1x128xf32>
    %131 = arith.mulf %128, %128 : vector<1x128xf32>
    %132 = arith.subf %130, %131 : vector<1x128xf32>
    %cst_52 = arith.constant 0.000000e+00 : f32
    %133 = vector.broadcast %cst_52 : f32 to vector<1x128xf32>
    %134 = arith.maximumf %132, %133 : vector<1x128xf32>
    %cst_53 = arith.constant 9.99999974E-6 : f32
    %135 = vector.broadcast %cst_53 : f32 to vector<1x128xf32>
    %136 = arith.addf %134, %135 : vector<1x128xf32>
    %137 = math.rsqrt %136 : vector<1x128xf32>
    %138 = arith.mulf %120, %137 : vector<1x128xf32>
    %139 = arith.mulf %128, %138 : vector<1x128xf32>
    %140 = arith.subf %121, %139 : vector<1x128xf32>
    %141 = vector.broadcast %138 : vector<1x128xf32> to vector<32x128xf32>
    %142 = arith.mulf %119, %141 : vector<32x128xf32>
    %143 = vector.broadcast %140 : vector<1x128xf32> to vector<32x128xf32>
    %144 = arith.addf %142, %143 : vector<32x128xf32>
    %145 = vector.extract_strided_slice %144 {offsets = [0, 0], sizes = [32, 64], strides = [1, 1]} : vector<32x128xf32> to vector<32x64xf32>
    %146 = arith.truncf %145 : vector<32x64xf32> to vector<32x64xbf16>
    %c160 = arith.constant 160 : index
    %c0_54 = arith.constant 0 : index
    %147 = vector.load %arg1[%c160, %c0_54] : memref<224x128xbf16, #tpu.memory_space<vmem>>, vector<64x128xbf16>
    %cst_55 = arith.constant dense<0.000000e+00> : vector<32x128xf32>
    %148 = tpu.matmul %146, %147, %cst_55 {dimension_numbers = #tpu.dot_dimension_numbers<[1], [0], [0], [1], [0, 0, 1, 1], [], []>} : vector<32x64xbf16>, vector<64x128xbf16>, vector<32x128xf32> -> vector<32x128xf32>
    %c5 = arith.constant 5 : index
    %c0_56 = arith.constant 0 : index
    %149 = vector.load %arg2[%c5, %c0_56] : memref<16x128xf32, #tpu.memory_space<vmem>>, vector<1x128xf32>
    %150 = vector.broadcast %149 : vector<1x128xf32> to vector<32x128xf32>
    %151 = arith.addf %148, %150 : vector<32x128xf32>
    %152 = math.tanh %151 : vector<32x128xf32>
    %c0_57 = arith.constant 0 : index
    %c0_58 = arith.constant 0 : index
    %153 = vector.load %arg3[%c0_57, %c0_58] : memref<32x128xf32, #tpu.memory_space<vmem>>, vector<32x128xf32>
    tpu.vector_store %arg3[%c0_57, %c0_58], %152 {strides = array<i32>} : memref<32x128xf32, #tpu.memory_space<vmem>>, vector<32x128xf32>,
    return
  }
}

</mosaic_0001>

<llo_original>
// kernel: forward.1
$region0: #{forward.1}
  #allocation0 [shape = 'u32[]', space=smem, size = 0x4, offset = 0x4, fixed_abs, tag = 'smem constant byte address 0x4 - core index']
  #allocation1 [shape = 'u32[144,128]{1,0:T(1,128)}', space=vmem, size = 0x12000, scoped, tag = 'internal scratch']
  %s0 = inlined_call_operand.vmem [shape: f32[32,16], index: 0, kind: input, shape index: {}]
  %s1 = inlined_call_operand.hbm [shape: bf16[224,128], index: 1, kind: input, shape index: {}]
  %s2 = inlined_call_operand.vmem [shape: f32[16,128], index: 2, kind: input, shape index: {}]
  %s3 = inlined_call_operand.vmem [shape: f32[32,128], index: 3, kind: output, shape index: {}]
  %s4 = sld [smem:[#allocation0]]
  $region26: #{forward.1} parent=0
    _
  %s6 = ssub.s32 1, %s4
  %s7 = scalar_select 0, %s6, %s4
  $region1: #{forward.1} parent=0
    #allocation2 [shape = 'u8[57344]{0}', space=vmem, size = 0xe000, scoped, tag = 'input window, operand 1, single buffered']
    #allocation3 [shape = 's32[1]{0}', space=sflag, size = 0x4, scoped, tag = 'scoped memory for forward.1']
    %8 = vsyncpa [#allocation3], 0
    // Predicated region
    $region2: #{forward.1} parent=1 // pred_check
      _
    $region3: #{forward.1} parent=1 // pred_check_branch
      %10 = sbr.rel (0) target = $region5
    $region4: #{forward.1} parent=1 // pred_region
      _
    $region5: #{forward.1} parent=1 // pred_fallthru
      _
    // Predicated region
    $region6: #{forward.1} parent=1 // pred_check
      _
    $region7: #{forward.1} parent=1 // pred_check_branch
      %12 = sbr.rel (0) target = $region9
    $region8: #{forward.1} parent=1 // pred_region
      %s14 = ssub.s32 1792, 1792
      %15 = vsyncadd [#allocation3], %s14
      %s16 = sshll.u32 [#allocation2], 4
      %s17 = int_to_ptr.vmem [resolvable:$true] %s16
      %22 = dma.hbm_to_vmem [thread:$0]  %s1, 1792, %s17, [#allocation3], 64, 64, 4
    $region9: #{forward.1} parent=1 // pred_fallthru
      _
    // Predicated region
    $region10: #{forward.1} parent=1 // pred_check
      _
    $region11: #{forward.1} parent=1 // pred_check_branch
      %24 = sbr.rel (0) target = $region13
    $region12: #{forward.1} parent=1 // pred_region
      _
    $region13: #{forward.1} parent=1 // pred_fallthru
      _
    // Predicated region
    $region14: #{forward.1} parent=1 // pred_check
      _
    $region15: #{forward.1} parent=1 // pred_check_branch
      %26 = sbr.rel (0) target = $region17
    $region16: #{forward.1} parent=1 // pred_region
      %27 = dma.done [#allocation3], 1792
    $region17: #{forward.1} parent=1 // pred_fallthru
      _
    %v29 = vld [vmem:[%s0] sm:$0xff]
    %v30 = vld [vmem:[%s0 + $0x8] sm:$0xff]
    %v31 = vld [vmem:[%s0 + $0x10] sm:$0xff]
    %v32 = vld [vmem:[%s0 + $0x18] sm:$0xff]
    %v33 = vpack.c.bf16 %v30, %v29
    %v34 = vpack.c.bf16 %v32, %v31
    %v35 = vld [vmem:[#allocation2] sm:$0xf]
    %v36 = vld [vmem:[#allocation2 + $0x4] sm:$0xf]
    %v37 = vld [vmem:[%s2] sm:$0x1]
    %v38 = vlaneseq
    %v39 = vshrl.u32 %v38, 7
    %v40 = vsub.s32 0, %v39
    %v41 = vrot.slane %v37, %v40
    %v44 = vunpack.c.l.b16 %v35
    %v45 = vunpack.c.l.b16 %v36
    %v46 = vpack.c.b16 %v45, %v44
    %vm48 = vcmask 130048
    %v50 = vsel %vm48, %v33, 0
    %v53 = vsel %vm48, %v34, 0
    %55 = vmatprep.subr.bf16.mxu0 0
    %56 = vmatpush1.bf16.msra.mxu0 %v46
    %57 = vmatprep.subr.bf16.mxu0 0
    %58 = vmatpush1.bf16.msra.mxu0 0
    %59 = vmatprep.subr.bf16.mxu0 0
    %60 = vmatpush1.bf16.msra.mxu0 0
    %61 = vmatprep.subr.bf16.mxu0 0
    %62 = vmatpush1.bf16.msra.mxu0 0
    %63 = vmatprep.subr.bf16.mxu0 0
    %64 = vmatpush1.bf16.msra.mxu0 0
    %65 = vmatprep.subr.bf16.mxu0 0
    %66 = vmatpush1.bf16.msra.mxu0 0
    %67 = vmatprep.subr.bf16.mxu0 0
    %68 = vmatpush1.bf16.msra.mxu0 0
    %69 = vmatprep.subr.bf16.mxu0 0
    %70 = vmatpush1.bf16.msra.mxu0 0
    %71 = vmatprep.subr.bf16.mxu0 0
    %72 = vmatpush1.bf16.msra.mxu0 0
    %73 = vmatprep.subr.bf16.mxu0 0
    %74 = vmatpush1.bf16.msra.mxu0 0
    %75 = vmatprep.subr.bf16.mxu0 0
    %76 = vmatpush1.bf16.msra.mxu0 0
    %77 = vmatprep.subr.bf16.mxu0 0
    %78 = vmatpush1.bf16.msra.mxu0 0
    %79 = vmatprep.subr.bf16.mxu0 0
    %80 = vmatpush1.bf16.msra.mxu0 0
    %81 = vmatprep.subr.bf16.mxu0 0
    %82 = vmatpush1.bf16.msra.mxu0 0
    %83 = vmatprep.subr.bf16.mxu0 0
    %84 = vmatpush1.bf16.msra.mxu0 0
    %85 = vmatprep.subr.bf16.mxu0 0
    %86 = vmatpush1.bf16.msra.mxu0 0
    %87 = vmatprep.mubr.bf16.mxu0 0
    %88 = vmatmul.mubr.bf16.gmra.mrb[0].mxu0 %v50
    %v89 = vpop.f32.mrb[0].mxu0
    %v90 = vadd.f32 %v41, %v89
    %v91 = vpop.f32.mrb[0].mxu0
    %v92 = vpop.f32.mrb[0].mxu0
    %v93 = vadd.f32 %v41, %v92
    %v94 = vpop.f32.mrb[0].mxu0
    %95 = vmatprep.mubr.bf16.mxu0 0
    %96 = vmatmul.mubr.bf16.gmra.mrb[0].mxu0 %v53
    %v97 = vpop.f32.mrb[0].mxu0
    %v98 = vadd.f32 %v41, %v97
    %v99 = vpop.f32.mrb[0].mxu0
    %v100 = vpop.f32.mrb[0].mxu0
    %v101 = vadd.f32 %v41, %v100
    %v102 = vpop.f32.mrb[0].mxu0
    %103 = vdwg.mxu0
    %v104 = vmax.f32 %v90, 0.0
    %v105 = vmax.f32 %v93, 0.0
    %v106 = vmax.f32 %v98, 0.0
    %v107 = vmax.f32 %v101, 0.0
    %v108 = vld [vmem:[%s2 + $0x6] sm:$0x1]
    %v109 = vld [vmem:[%s2 + $0x7] sm:$0x1]
    %v110 = vadd.f32 %v104, %v105
    %v111 = vadd.f32 %v110, %v106
    %v112 = vadd.f32 %v111, %v107
    %v113 = vrot.slane %v112, 4
    %v114 = vadd.f32 %v112, %v113
    %v115 = vrot.slane %v114, 2
    %v116 = vadd.f32 %v114, %v115
    %v117 = vrot.slane %v116, 1
    %v118 = vadd.f32 %v116, %v117
    %v119 = vmul.f32 %v104, %v104
    %v120 = vmul.f32 %v105, %v105
    %v121 = vmul.f32 %v106, %v106
    %v122 = vmul.f32 %v107, %v107
    %v123 = vadd.f32 %v119, %v120
    %v124 = vadd.f32 %v123, %v121
    %v125 = vadd.f32 %v124, %v122
    %v126 = vrot.slane %v125, 4
    %v127 = vadd.f32 %v125, %v126
    %v128 = vrot.slane %v127, 2
    %v129 = vadd.f32 %v127, %v128
    %v130 = vrot.slane %v129, 1
    %v131 = vadd.f32 %v129, %v130
    %v132 = vmul.f32 %v118, 0.03125
    %v133 = vmul.f32 %v131, 0.03125
    %v134 = vmul.f32 %v132, %v132
    %v135 = vsub.f32 %v133, %v134
    %v136 = vmax.f32 %v135, 0.0
    %v137 = vadd.f32 %v136, 1e-05
    %v138 = vrsqrt.pop %v137
    %v139 = vmul.f32 %v108, %v138
    %v140 = vmul.f32 %v132, %v139
    %v141 = vsub.f32 %v109, %v140
    %v142 = vlaneseq
    %v143 = vshrl.u32 %v142, 7
    %v144 = vsub.s32 0, %v143
    %v145 = vrot.slane %v139, %v144
    %v146 = vmul.f32 %v104, %v145
    %v147 = vmul.f32 %v105, %v145
    %v148 = vmul.f32 %v106, %v145
    %v149 = vmul.f32 %v107, %v145
    %v150 = vlaneseq
    %v151 = vshrl.u32 %v150, 7
    %v152 = vsub.s32 0, %v151
    %v153 = vrot.slane %v141, %v152
    %v154 = vadd.f32 %v146, %v153
    %v155 = vadd.f32 %v147, %v153
    %v156 = vadd.f32 %v148, %v153
    %v157 = vadd.f32 %v149, %v153
    %v158 = vpack.c.bf16 %v155, %v154
    %v159 = vpack.c.bf16 %v157, %v156
    %v160 = vld [vmem:[#allocation2 + $0x8] sm:$0xf]
    %v161 = vld [vmem:[#allocation2 + $0xc] sm:$0xf]
    %v162 = vld [vmem:[#allocation2 + $0x10] sm:$0xf]
    %v163 = vld [vmem:[#allocation2 + $0x14] sm:$0xf]
    %v164 = vld [vmem:[#allocation2 + $0x18] sm:$0xf]
    %v165 = vld [vmem:[#allocation2 + $0x1c] sm:$0xf]
    %v166 = vld [vmem:[#allocation2 + $0x20] sm:$0xf]
    %v167 = vld [vmem:[#allocation2 + $0x24] sm:$0xf]
    %v168 = vld [vmem:[%s2 + $0x1] sm:$0x1]
    %v169 = vlaneseq
    %v170 = vshrl.u32 %v169, 7
    %v171 = vsub.s32 0, %v170
    %v172 = vrot.slane %v168, %v171
    %v181 = vunpack.c.l.b16 %v160
    %v182 = vunpack.c.l.b16 %v161
    %v183 = vunpack.c.l.b16 %v162
    %v184 = vunpack.c.l.b16 %v163
    %v185 = vunpack.c.l.b16 %v164
    %v186 = vunpack.c.l.b16 %v165
    %v187 = vunpack.c.l.b16 %v166
    %v188 = vunpack.c.l.b16 %v167
    %v189 = vpack.c.b16 %v182, %v181
    %v190 = vpack.c.b16 %v184, %v183
    %v191 = vpack.c.b16 %v186, %v185
    %v192 = vpack.c.b16 %v188, %v187
    %vm197 = vcmask 523264
    %v199 = vsel %vm197, %v158, 0
    %v202 = vsel %vm197, %v159, 0
    %204 = vmatprep.subr.bf16.mxu0 0
    %205 = vmatpush1.bf16.msra.mxu0 %v189
    %206 = vmatprep.subr.bf16.mxu0 0
    %207 = vmatpush1.bf16.msra.mxu0 %v190
    %208 = vmatprep.subr.bf16.mxu0 0
    %209 = vmatpush1.bf16.msra.mxu0 %v191
    %210 = vmatprep.subr.bf16.mxu0 0
    %211 = vmatpush1.bf16.msra.mxu0 %v192
    %212 = vmatprep.subr.bf16.mxu0 0
    %213 = vmatpush1.bf16.msra.mxu0 0
    %214 = vmatprep.subr.bf16.mxu0 0
    %215 = vmatpush1.bf16.msra.mxu0 0
    %216 = vmatprep.subr.bf16.mxu0 0
    %217 = vmatpush1.bf16.msra.mxu0 0
    %218 = vmatprep.subr.bf16.mxu0 0
    %219 = vmatpush1.bf16.msra.mxu0 0
    %220 = vmatprep.subr.bf16.mxu0 0
    %221 = vmatpush1.bf16.msra.mxu0 0
    %222 = vmatprep.subr.bf16.mxu0 0
    %223 = vmatpush1.bf16.msra.mxu0 0
    %224 = vmatprep.subr.bf16.mxu0 0
    %225 = vmatpush1.bf16.msra.mxu0 0
    %226 = vmatprep.subr.bf16.mxu0 0
    %227 = vmatpush1.bf16.msra.mxu0 0
    %228 = vmatprep.subr.bf16.mxu0 0
    %229 = vmatpush1.bf16.msra.mxu0 0
    %230 = vmatprep.subr.bf16.mxu0 0
    %231 = vmatpush1.bf16.msra.mxu0 0
    %232 = vmatprep.subr.bf16.mxu0 0
    %233 = vmatpush1.bf16.msra.mxu0 0
    %234 = vmatprep.subr.bf16.mxu0 0
    %235 = vmatpush1.bf16.msra.mxu0 0
    %236 = vmatprep.mubr.bf16.mxu0 0
    %237 = vmatmul.mubr.bf16.gmra.mrb[0].mxu0 %v199
    %v238 = vpop.f32.mrb[0].mxu0
    %v239 = vadd.f32 %v172, %v238
    %v240 = vpop.f32.mrb[0].mxu0
    %v241 = vpop.f32.mrb[0].mxu0
    %v242 = vadd.f32 %v172, %v241
    %v243 = vpop.f32.mrb[0].mxu0
    %244 = vmatprep.mubr.bf16.mxu0 0
    %245 = vmatmul.mubr.bf16.gmra.mrb[0].mxu0 %v202
    %v246 = vpop.f32.mrb[0].mxu0
    %v247 = vadd.f32 %v172, %v246
    %v248 = vpop.f32.mrb[0].mxu0
    %v249 = vpop.f32.mrb[0].mxu0
    %v250 = vadd.f32 %v172, %v249
    %v251 = vpop.f32.mrb[0].mxu0
    %252 = vdwg.mxu0
    %v253 = vmax.f32 %v239, 0.0
    %v254 = vmax.f32 %v242, 0.0
    %v255 = vmax.f32 %v247, 0.0
    %v256 = vmax.f32 %v250, 0.0
    %v257 = vld [vmem:[%s2 + $0x8] sm:$0x1]
    %v258 = vld [vmem:[%s2 + $0x9] sm:$0x1]
    %v259 = vadd.f32 %v253, %v254
    %v260 = vadd.f32 %v259, %v255
    %v261 = vadd.f32 %v260, %v256
    %v262 = vrot.slane %v261, 4
    %v263 = vadd.f32 %v261, %v262
    %v264 = vrot.slane %v263, 2
    %v265 = vadd.f32 %v263, %v264
    %v266 = vrot.slane %v265, 1
    %v267 = vadd.f32 %v265, %v266
    %v268 = vmul.f32 %v253, %v253
    %v269 = vmul.f32 %v254, %v254
    %v270 = vmul.f32 %v255, %v255
    %v271 = vmul.f32 %v256, %v256
    %v272 = vadd.f32 %v268, %v269
    %v273 = vadd.f32 %v272, %v270
    %v274 = vadd.f32 %v273, %v271
    %v275 = vrot.slane %v274, 4
    %v276 = vadd.f32 %v274, %v275
    %v277 = vrot.slane %v276, 2
    %v278 = vadd.f32 %v276, %v277
    %v279 = vrot.slane %v278, 1
    %v280 = vadd.f32 %v278, %v279
    %v281 = vmul.f32 %v267, 0.03125
    %v282 = vmul.f32 %v280, 0.03125
    %v283 = vmul.f32 %v281, %v281
    %v284 = vsub.f32 %v282, %v283
    %v285 = vmax.f32 %v284, 0.0
    %v286 = vadd.f32 %v285, 1e-05
    %v287 = vrsqrt.pop %v286
    %v288 = vmul.f32 %v257, %v287
    %v289 = vmul.f32 %v281, %v288
    %v290 = vsub.f32 %v258, %v289
    %v291 = vlaneseq
    %v292 = vshrl.u32 %v291, 7
    %v293 = vsub.s32 0, %v292
    %v294 = vrot.slane %v288, %v293
    %v295 = vmul.f32 %v253, %v294
    %v296 = vmul.f32 %v254, %v294
    %v297 = vmul.f32 %v255, %v294
    %v298 = vmul.f32 %v256, %v294
    %v299 = vlaneseq
    %v300 = vshrl.u32 %v299, 7
    %v301 = vsub.s32 0, %v300
    %v302 = vrot.slane %v290, %v301
    %v303 = vadd.f32 %v295, %v302
    %v304 = vadd.f32 %v296, %v302
    %v305 = vadd.f32 %v297, %v302
    %v306 = vadd.f32 %v298, %v302
    %v307 = vpack.c.bf16 %v304, %v303
    %v308 = vpack.c.bf16 %v306, %v305
    %v309 = vld [vmem:[#allocation2 + $0x28] sm:$0xf]
    %v310 = vld [vmem:[#allocation2 + $0x2c] sm:$0xf]
    %v311 = vld [vmem:[#allocation2 + $0x30] sm:$0xf]
    %v312 = vld [vmem:[#allocation2 + $0x34] sm:$0xf]
    %v313 = vld [vmem:[%s2 + $0x2] sm:$0x1]
    %v314 = vlaneseq
    %v315 = vshrl.u32 %v314, 7
    %v316 = vsub.s32 0, %v315
    %v317 = vrot.slane %v313, %v316
    %v322 = vunpack.c.l.b16 %v309
    %v323 = vunpack.c.l.b16 %v310
    %v324 = vunpack.c.l.b16 %v311
    %v325 = vunpack.c.l.b16 %v312
    %v326 = vpack.c.b16 %v323, %v322
    %v327 = vpack.c.b16 %v325, %v324
    %vm330 = vcmask 261120
    %v332 = vsel %vm330, %v307, 0
    %v335 = vsel %vm330, %v308, 0
    %337 = vmatprep.subr.bf16.mxu0 0
    %338 = vmatpush1.bf16.msra.mxu0 %v326
    %339 = vmatprep.subr.bf16.mxu0 0
    %340 = vmatpush1.bf16.msra.mxu0 %v327
    %341 = vmatprep.subr.bf16.mxu0 0
    %342 = vmatpush1.bf16.msra.mxu0 0
    %343 = vmatprep.subr.bf16.mxu0 0
    %344 = vmatpush1.bf16.msra.mxu0 0
    %345 = vmatprep.subr.bf16.mxu0 0
    %346 = vmatpush1.bf16.msra.mxu0 0
    %347 = vmatprep.subr.bf16.mxu0 0
    %348 = vmatpush1.bf16.msra.mxu0 0
    %349 = vmatprep.subr.bf16.mxu0 0
    %350 = vmatpush1.bf16.msra.mxu0 0
    %351 = vmatprep.subr.bf16.mxu0 0
    %352 = vmatpush1.bf16.msra.mxu0 0
    %353 = vmatprep.subr.bf16.mxu0 0
    %354 = vmatpush1.bf16.msra.mxu0 0
    %355 = vmatprep.subr.bf16.mxu0 0
    %356 = vmatpush1.bf16.msra.mxu0 0
    %357 = vmatprep.subr.bf16.mxu0 0
    %358 = vmatpush1.bf16.msra.mxu0 0
    %359 = vmatprep.subr.bf16.mxu0 0
    %360 = vmatpush1.bf16.msra.mxu0 0
    %361 = vmatprep.subr.bf16.mxu0 0
    %362 = vmatpush1.bf16.msra.mxu0 0
    %363 = vmatprep.subr.bf16.mxu0 0
    %364 = vmatpush1.bf16.msra.mxu0 0
    %365 = vmatprep.subr.bf16.mxu0 0
    %366 = vmatpush1.bf16.msra.mxu0 0
    %367 = vmatprep.subr.bf16.mxu0 0
    %368 = vmatpush1.bf16.msra.mxu0 0
    %369 = vmatprep.mubr.bf16.mxu0 0
    %370 = vmatmul.mubr.bf16.gmra.mrb[0].mxu0 %v332
    %v371 = vpop.f32.mrb[0].mxu0
    %v372 = vadd.f32 %v317, %v371
    %v373 = vpop.f32.mrb[0].mxu0
    %v374 = vpop.f32.mrb[0].mxu0
    %v375 = vadd.f32 %v317, %v374
    %v376 = vpop.f32.mrb[0].mxu0
    %377 = vmatprep.mubr.bf16.mxu0 0
    %378 = vmatmul.mubr.bf16.gmra.mrb[0].mxu0 %v335
    %v379 = vpop.f32.mrb[0].mxu0
    %v380 = vadd.f32 %v317, %v379
    %v381 = vpop.f32.mrb[0].mxu0
    %v382 = vpop.f32.mrb[0].mxu0
    %v383 = vadd.f32 %v317, %v382
    %v384 = vpop.f32.mrb[0].mxu0
    %385 = vdwg.mxu0
    %v386 = vmax.f32 %v372, 0.0
    %v387 = vmax.f32 %v375, 0.0
    %v388 = vmax.f32 %v380, 0.0
    %v389 = vmax.f32 %v383, 0.0
    %v390 = vpack.c.bf16 %v387, %v386
    %v391 = vpack.c.bf16 %v389, %v388
    %v392 = vld [vmem:[#allocation2 + $0x38] sm:$0xf]
    %v393 = vld [vmem:[#allocation2 + $0x3c] sm:$0xf]
    %v394 = vld [vmem:[%s2 + $0x3] sm:$0x1]
    %v395 = vlaneseq
    %v396 = vshrl.u32 %v395, 7
    %v397 = vsub.s32 0, %v396
    %v398 = vrot.slane %v394, %v397
    %v401 = vunpack.c.l.b16 %v392
    %v402 = vunpack.c.l.b16 %v393
    %v403 = vpack.c.b16 %v402, %v401
    %v406 = vsel %vm48, %v390, 0
    %v409 = vsel %vm48, %v391, 0
    %411 = vmatprep.subr.bf16.mxu0 0
    %412 = vmatpush1.bf16.msra.mxu0 %v403
    %413 = vmatprep.subr.bf16.mxu0 0
    %414 = vmatpush1.bf16.msra.mxu0 0
    %415 = vmatprep.subr.bf16.mxu0 0
    %416 = vmatpush1.bf16.msra.mxu0 0
    %417 = vmatprep.subr.bf16.mxu0 0
    %418 = vmatpush1.bf16.msra.mxu0 0
    %419 = vmatprep.subr.bf16.mxu0 0
    %420 = vmatpush1.bf16.msra.mxu0 0
    %421 = vmatprep.subr.bf16.mxu0 0
    %422 = vmatpush1.bf16.msra.mxu0 0
    %423 = vmatprep.subr.bf16.mxu0 0
    %424 = vmatpush1.bf16.msra.mxu0 0
    %425 = vmatprep.subr.bf16.mxu0 0
    %426 = vmatpush1.bf16.msra.mxu0 0
    %427 = vmatprep.subr.bf16.mxu0 0
    %428 = vmatpush1.bf16.msra.mxu0 0
    %429 = vmatprep.subr.bf16.mxu0 0
    %430 = vmatpush1.bf16.msra.mxu0 0
    %431 = vmatprep.subr.bf16.mxu0 0
    %432 = vmatpush1.bf16.msra.mxu0 0
    %433 = vmatprep.subr.bf16.mxu0 0
    %434 = vmatpush1.bf16.msra.mxu0 0
    %435 = vmatprep.subr.bf16.mxu0 0
    %436 = vmatpush1.bf16.msra.mxu0 0
    %437 = vmatprep.subr.bf16.mxu0 0
    %438 = vmatpush1.bf16.msra.mxu0 0
    %439 = vmatprep.subr.bf16.mxu0 0
    %440 = vmatpush1.bf16.msra.mxu0 0
    %441 = vmatprep.subr.bf16.mxu0 0
    %442 = vmatpush1.bf16.msra.mxu0 0
    %443 = vmatprep.mubr.bf16.mxu0 0
    %444 = vmatmul.mubr.bf16.gmra.mrb[0].mxu0 %v406
    %v445 = vpop.f32.mrb[0].mxu0
    %v446 = vadd.f32 %v398, %v445
    %v447 = vpop.f32.mrb[0].mxu0
    %v448 = vpop.f32.mrb[0].mxu0
    %v449 = vadd.f32 %v398, %v448
    %v450 = vpop.f32.mrb[0].mxu0
    %451 = vmatprep.mubr.bf16.mxu0 0
    %452 = vmatmul.mubr.bf16.gmra.mrb[0].mxu0 %v409
    %v453 = vpop.f32.mrb[0].mxu0
    %v454 = vadd.f32 %v398, %v453
    %v455 = vpop.f32.mrb[0].mxu0
    %v456 = vpop.f32.mrb[0].mxu0
    %v457 = vadd.f32 %v398, %v456
    %v458 = vpop.f32.mrb[0].mxu0
    %459 = vdwg.mxu0
    %v460 = vmax.f32 %v446, 0.0
    %v461 = vmax.f32 %v449, 0.0
    %v462 = vmax.f32 %v454, 0.0
    %v463 = vmax.f32 %v457, 0.0
    %v464 = vld [vmem:[%s2 + $0xa] sm:$0x1]
    %v465 = vld [vmem:[%s2 + $0xb] sm:$0x1]
    %v466 = vadd.f32 %v460, %v461
    %v467 = vadd.f32 %v466, %v462
    %v468 = vadd.f32 %v467, %v463
    %v469 = vrot.slane %v468, 4
    %v470 = vadd.f32 %v468, %v469
    %v471 = vrot.slane %v470, 2
    %v472 = vadd.f32 %v470, %v471
    %v473 = vrot.slane %v472, 1
    %v474 = vadd.f32 %v472, %v473
    %v475 = vmul.f32 %v460, %v460
    %v476 = vmul.f32 %v461, %v461
    %v477 = vmul.f32 %v462, %v462
    %v478 = vmul.f32 %v463, %v463
    %v479 = vadd.f32 %v475, %v476
    %v480 = vadd.f32 %v479, %v477
    %v481 = vadd.f32 %v480, %v478
    %v482 = vrot.slane %v481, 4
    %v483 = vadd.f32 %v481, %v482
    %v484 = vrot.slane %v483, 2
    %v485 = vadd.f32 %v483, %v484
    %v486 = vrot.slane %v485, 1
    %v487 = vadd.f32 %v485, %v486
    %v488 = vmul.f32 %v474, 0.03125
    %v489 = vmul.f32 %v487, 0.03125
    %v490 = vmul.f32 %v488, %v488
    %v491 = vsub.f32 %v489, %v490
    %v492 = vmax.f32 %v491, 0.0
    %v493 = vadd.f32 %v492, 1e-05
    %v494 = vrsqrt.pop %v493
    %v495 = vmul.f32 %v464, %v494
    %v496 = vmul.f32 %v488, %v495
    %v497 = vsub.f32 %v465, %v496
    %v498 = vlaneseq
    %v499 = vshrl.u32 %v498, 7
    %v500 = vsub.s32 0, %v499
    %v501 = vrot.slane %v495, %v500
    %v502 = vmul.f32 %v460, %v501
    %v503 = vmul.f32 %v461, %v501
    %v504 = vmul.f32 %v462, %v501
    %v505 = vmul.f32 %v463, %v501
    %v506 = vlaneseq
    %v507 = vshrl.u32 %v506, 7
    %v508 = vsub.s32 0, %v507
    %v509 = vrot.slane %v497, %v508
    %v510 = vadd.f32 %v502, %v509
    %v511 = vadd.f32 %v503, %v509
    %v512 = vadd.f32 %v504, %v509
    %v513 = vadd.f32 %v505, %v509
    %v514 = vpack.c.bf16 %v511, %v510
    %v515 = vpack.c.bf16 %v513, %v512
    %v516 = vld [vmem:[#allocation2 + $0x40] sm:$0xf]
    %v517 = vld [vmem:[#allocation2 + $0x44] sm:$0xf]
    %v518 = vld [vmem:[#allocation2 + $0x48] sm:$0xf]
    %v519 = vld [vmem:[#allocation2 + $0x4c] sm:$0xf]
    %v520 = vld [vmem:[%s2 + $0x4] sm:$0x1]
    %v521 = vlaneseq
    %v522 = vshrl.u32 %v521, 7
    %v523 = vsub.s32 0, %v522
    %v524 = vrot.slane %v520, %v523
    %v529 = vunpack.c.l.b16 %v516
    %v530 = vunpack.c.l.b16 %v517
    %v531 = vunpack.c.l.b16 %v518
    %v532 = vunpack.c.l.b16 %v519
    %v533 = vpack.c.b16 %v530, %v529
    %v534 = vpack.c.b16 %v532, %v531
    %v538 = vsel %vm330, %v514, 0
    %v541 = vsel %vm330, %v515, 0
    %543 = vmatprep.subr.bf16.mxu0 0
    %544 = vmatpush1.bf16.msra.mxu0 %v533
    %545 = vmatprep.subr.bf16.mxu0 0
    %546 = vmatpush1.bf16.msra.mxu0 %v534
    %547 = vmatprep.subr.bf16.mxu0 0
    %548 = vmatpush1.bf16.msra.mxu0 0
    %549 = vmatprep.subr.bf16.mxu0 0
    %550 = vmatpush1.bf16.msra.mxu0 0
    %551 = vmatprep.subr.bf16.mxu0 0
    %552 = vmatpush1.bf16.msra.mxu0 0
    %553 = vmatprep.subr.bf16.mxu0 0
    %554 = vmatpush1.bf16.msra.mxu0 0
    %555 = vmatprep.subr.bf16.mxu0 0
    %556 = vmatpush1.bf16.msra.mxu0 0
    %557 = vmatprep.subr.bf16.mxu0 0
    %558 = vmatpush1.bf16.msra.mxu0 0
    %559 = vmatprep.subr.bf16.mxu0 0
    %560 = vmatpush1.bf16.msra.mxu0 0
    %561 = vmatprep.subr.bf16.mxu0 0
    %562 = vmatpush1.bf16.msra.mxu0 0
    %563 = vmatprep.subr.bf16.mxu0 0
    %564 = vmatpush1.bf16.msra.mxu0 0
    %565 = vmatprep.subr.bf16.mxu0 0
    %566 = vmatpush1.bf16.msra.mxu0 0
    %567 = vmatprep.subr.bf16.mxu0 0
    %568 = vmatpush1.bf16.msra.mxu0 0
    %569 = vmatprep.subr.bf16.mxu0 0
    %570 = vmatpush1.bf16.msra.mxu0 0
    %571 = vmatprep.subr.bf16.mxu0 0
    %572 = vmatpush1.bf16.msra.mxu0 0
    %573 = vmatprep.subr.bf16.mxu0 0
    %574 = vmatpush1.bf16.msra.mxu0 0
    %575 = vmatprep.mubr.bf16.mxu0 0
    %576 = vmatmul.mubr.bf16.gmra.mrb[0].mxu0 %v538
    %v577 = vpop.f32.mrb[0].mxu0
    %v578 = vadd.f32 %v524, %v577
    %v579 = vpop.f32.mrb[0].mxu0
    %v580 = vpop.f32.mrb[0].mxu0
    %v581 = vadd.f32 %v524, %v580
    %v582 = vpop.f32.mrb[0].mxu0
    %583 = vmatprep.mubr.bf16.mxu0 0
    %584 = vmatmul.mubr.bf16.gmra.mrb[0].mxu0 %v541
    %v585 = vpop.f32.mrb[0].mxu0
    %v586 = vadd.f32 %v524, %v585
    %v587 = vpop.f32.mrb[0].mxu0
    %v588 = vpop.f32.mrb[0].mxu0
    %v589 = vadd.f32 %v524, %v588
    %v590 = vpop.f32.mrb[0].mxu0
    %591 = vdwg.mxu0
    %v592 = vmax.f32 %v578, 0.0
    %v593 = vmax.f32 %v581, 0.0
    %v594 = vmax.f32 %v586, 0.0
    %v595 = vmax.f32 %v589, 0.0
    %v596 = vld [vmem:[%s2 + $0xc] sm:$0x1]
    %v597 = vld [vmem:[%s2 + $0xd] sm:$0x1]
    %v598 = vadd.f32 %v592, %v593
    %v599 = vadd.f32 %v598, %v594
    %v600 = vadd.f32 %v599, %v595
    %v601 = vrot.slane %v600, 4
    %v602 = vadd.f32 %v600, %v601
    %v603 = vrot.slane %v602, 2
    %v604 = vadd.f32 %v602, %v603
    %v605 = vrot.slane %v604, 1
    %v606 = vadd.f32 %v604, %v605
    %v607 = vmul.f32 %v592, %v592
    %v608 = vmul.f32 %v593, %v593
    %v609 = vmul.f32 %v594, %v594
    %v610 = vmul.f32 %v595, %v595
    %v611 = vadd.f32 %v607, %v608
    %v612 = vadd.f32 %v611, %v609
    %v613 = vadd.f32 %v612, %v610
    %v614 = vrot.slane %v613, 4
    %v615 = vadd.f32 %v613, %v614
    %v616 = vrot.slane %v615, 2
    %v617 = vadd.f32 %v615, %v616
    %v618 = vrot.slane %v617, 1
    %v619 = vadd.f32 %v617, %v618
    %v620 = vmul.f32 %v606, 0.03125
    %v621 = vmul.f32 %v619, 0.03125
    %v622 = vmul.f32 %v620, %v620
    %v623 = vsub.f32 %v621, %v622
    %v624 = vmax.f32 %v623, 0.0
    %v625 = vadd.f32 %v624, 1e-05
    %v626 = vrsqrt.pop %v625
    %v627 = vmul.f32 %v596, %v626
    %v628 = vmul.f32 %v620, %v627
    %v629 = vsub.f32 %v597, %v628
    %v630 = vlaneseq
    %v631 = vshrl.u32 %v630, 7
    %v632 = vsub.s32 0, %v631
    %v633 = vrot.slane %v627, %v632
    %v634 = vmul.f32 %v592, %v633
    %v635 = vmul.f32 %v593, %v633
    %v636 = vmul.f32 %v594, %v633
    %v637 = vmul.f32 %v595, %v633
    %v638 = vlaneseq
    %v639 = vshrl.u32 %v638, 7
    %v640 = vsub.s32 0, %v639
    %v641 = vrot.slane %v629, %v640
    %v642 = vadd.f32 %v634, %v641
    %v643 = vadd.f32 %v635, %v641
    %v644 = vadd.f32 %v636, %v641
    %v645 = vadd.f32 %v637, %v641
    %v646 = vpack.c.bf16 %v643, %v642
    %v647 = vpack.c.bf16 %v645, %v644
    %v648 = vld [vmem:[#allocation2 + $0x50] sm:$0xf]
    %v649 = vld [vmem:[#allocation2 + $0x54] sm:$0xf]
    %v650 = vld [vmem:[#allocation2 + $0x58] sm:$0xf]
    %v651 = vld [vmem:[#allocation2 + $0x5c] sm:$0xf]
    %v652 = vld [vmem:[#allocation2 + $0x60] sm:$0xf]
    %v653 = vld [vmem:[#allocation2 + $0x64] sm:$0xf]
    %v654 = vld [vmem:[#allocation2 + $0x68] sm:$0xf]
    %v655 = vld [vmem:[#allocation2 + $0x6c] sm:$0xf]
    %v656 = vld [vmem:[%s2 + $0x5] sm:$0x1]
    %v657 = vlaneseq
    %v658 = vshrl.u32 %v657, 7
    %v659 = vsub.s32 0, %v658
    %v660 = vrot.slane %v656, %v659
    %v669 = vunpack.c.l.b16 %v648
    %v670 = vunpack.c.l.b16 %v649
    %v671 = vunpack.c.l.b16 %v650
    %v672 = vunpack.c.l.b16 %v651
    %v673 = vunpack.c.l.b16 %v652
    %v674 = vunpack.c.l.b16 %v653
    %v675 = vunpack.c.l.b16 %v654
    %v676 = vunpack.c.l.b16 %v655
    %v677 = vpack.c.b16 %v670, %v669
    %v678 = vpack.c.b16 %v672, %v671
    %v679 = vpack.c.b16 %v674, %v673
    %v680 = vpack.c.b16 %v676, %v675
    %v686 = vsel %vm197, %v646, 0
    %v689 = vsel %vm197, %v647, 0
    %691 = vmatprep.subr.bf16.mxu0 0
    %692 = vmatpush1.bf16.msra.mxu0 %v677
    %693 = vmatprep.subr.bf16.mxu0 0
    %694 = vmatpush1.bf16.msra.mxu0 %v678
    %695 = vmatprep.subr.bf16.mxu0 0
    %696 = vmatpush1.bf16.msra.mxu0 %v679
    %697 = vmatprep.subr.bf16.mxu0 0
    %698 = vmatpush1.bf16.msra.mxu0 %v680
    %699 = vmatprep.subr.bf16.mxu0 0
    %700 = vmatpush1.bf16.msra.mxu0 0
    %701 = vmatprep.subr.bf16.mxu0 0
    %702 = vmatpush1.bf16.msra.mxu0 0
    %703 = vmatprep.subr.bf16.mxu0 0
    %704 = vmatpush1.bf16.msra.mxu0 0
    %705 = vmatprep.subr.bf16.mxu0 0
    %706 = vmatpush1.bf16.msra.mxu0 0
    %707 = vmatprep.subr.bf16.mxu0 0
    %708 = vmatpush1.bf16.msra.mxu0 0
    %709 = vmatprep.subr.bf16.mxu0 0
    %710 = vmatpush1.bf16.msra.mxu0 0
    %711 = vmatprep.subr.bf16.mxu0 0
    %712 = vmatpush1.bf16.msra.mxu0 0
    %713 = vmatprep.subr.bf16.mxu0 0
    %714 = vmatpush1.bf16.msra.mxu0 0
    %715 = vmatprep.subr.bf16.mxu0 0
    %716 = vmatpush1.bf16.msra.mxu0 0
    %717 = vmatprep.subr.bf16.mxu0 0
    %718 = vmatpush1.bf16.msra.mxu0 0
    %719 = vmatprep.subr.bf16.mxu0 0
    %720 = vmatpush1.bf16.msra.mxu0 0
    %721 = vmatprep.subr.bf16.mxu0 0
    %722 = vmatpush1.bf16.msra.mxu0 0
    %723 = vmatprep.mubr.bf16.mxu0 0
    %724 = vmatmul.mubr.bf16.gmra.mrb[0].mxu0 %v686
    %v725 = vpop.f32.mrb[0].mxu0
    %v726 = vadd.f32 %v660, %v725
    %v727 = vpop.f32.mrb[0].mxu0
    %v728 = vpop.f32.mrb[0].mxu0
    %v729 = vadd.f32 %v660, %v728
    %v730 = vpop.f32.mrb[0].mxu0
    %731 = vmatprep.mubr.bf16.mxu0 0
    %732 = vmatmul.mubr.bf16.gmra.mrb[0].mxu0 %v689
    %v733 = vpop.f32.mrb[0].mxu0
    %v734 = vadd.f32 %v660, %v733
    %v735 = vpop.f32.mrb[0].mxu0
    %v736 = vpop.f32.mrb[0].mxu0
    %v737 = vadd.f32 %v660, %v736
    %v738 = vpop.f32.mrb[0].mxu0
    %739 = vdwg.mxu0
    %v740 = vtanh.pop %v726
    %v741 = vtanh.pop %v729
    %v742 = vtanh.pop %v734
    %v743 = vtanh.pop %v737
    %744 = vst [vmem:[%s3] sm:$0xff] %v740
    %745 = vst [vmem:[%s3 + $0x8] sm:$0xff] %v741
    %746 = vst [vmem:[%s3 + $0x10] sm:$0xff] %v742
    %747 = vst [vmem:[%s3 + $0x18] sm:$0xff] %v743
    // Predicated region
    $region18: #{forward.1} parent=1 // pred_check
      _
    $region19: #{forward.1} parent=1 // pred_check_branch
      %749 = sbr.rel (0) target = $region21
    $region20: #{forward.1} parent=1 // pred_region
      _
    $region21: #{forward.1} parent=1 // pred_fallthru
      _
    // Predicated region
    $region22: #{forward.1} parent=1 // pred_check
      _
    $region23: #{forward.1} parent=1 // pred_check_branch
      %751 = sbr.rel (0) target = $region25
    $region24: #{forward.1} parent=1 // pred_region
      _
    $region25: #{forward.1} parent=1 // pred_fallthru
      _
    %752 = vsyncpa [#allocation3], 1

</llo_original>
